<compile_context>
chip_gen: v6e
topology: v6e:2x2x1
jax: 0.10.0
libtpu: 0.0.40
codegen_flags: <defaults>
</compile_context>

<pallas_src>
import jax
import jax.numpy as jnp
from jax.experimental import pallas as pl
from jax.experimental.pallas import tpu as pltpu


def _source_amp_kernel(w_ref, trace_ref, out_ref):
    # w_ref:     (R, 1)     flattened (iy*nx + ix) weight column for this row tile
    # trace_ref: (1, 1, Tt) this shot's trace for this time tile
    # out_ref:   (1, R, Tt)
    out_ref[0, :, :] = w_ref[...] * trace_ref[0]   # (R,1)*(1,Tt) -> (R,Tt), pure VPU


def _vmem_budget():
    """Generation-aware (vmem_limit_bytes, per-block byte target)."""
    try:
        info = pltpu.get_tpu_info()
        cap = int(getattr(info, "vmem_capacity_bytes", 128 << 20))
    except Exception:
        cap = 128 << 20
    vmem_limit = max(16 << 20, cap // 2)            # 64 MiB on v5e/v6e, 32 MiB on v7x
    # 2x double-buffered output block + inputs + slack must fit vmem_limit:
    # target such that ~4*target + 8 MiB <= vmem_limit.
    target_bytes = max(1 << 20, (vmem_limit - (8 << 20)) // 4)   # ~14 MiB / ~6 MiB
    return vmem_limit, target_bytes


def _largest_aligned_divisor(n, cap, align):
    """Largest d <= cap with d % align == 0 and n % d == 0, or 0 if none."""
    d = min(n, cap)
    d = (d // align) * align
    while d >= align:
        if n % d == 0:
            return d
        d -= align
    return 0


def _pick_tiles(n_rows, n_time, itemsize, target_bytes, n_shots):
    """Pick (R, Tt) obeying the (sublane, 128) block-shape rule, ~target_bytes/block."""
    sub = max(8, 32 // itemsize)          # 8 for f32, 16 for bf16, 32 for int8

    # Time tile: prefer the full time dim (single contiguous writeback DMA per
    # block) whenever even a minimum-height (sub, T) block fits the budget, or
    # when T is not 128-aligned (full dim is always a legal lane block).
    if n_time % 128 != 0 or n_time * itemsize * sub <= target_bytes:
        tt = n_time
    else:
        tt = max(128, (target_bytes // (itemsize * sub * 128)) * 128)
        tt = min(tt, n_time)
        d = _largest_aligned_divisor(n_time, tt, 128)   # avoid a partial time tail
        if d:
            tt = d

    # Row tile: target_bytes / (tt * itemsize); prefer a sublane-aligned divisor
    # of n_rows so every block is full (unmasked vst, uniform DMA sizes).
    r_cap = max(1, target_bytes // (tt * itemsize))
    if r_cap >= n_rows:
        r = n_rows
    else:
        d = _largest_aligned_divisor(n_rows, r_cap, sub)
        r = d if d else min(n_rows, max(sub, (r_cap // sub) * sub))

    # Ensure >= 2 grid blocks so v7x's second TensorCore is not idle.
    total = n_shots * pl.cdiv(n_time, tt) * pl.cdiv(n_rows, r)
    if total < 2:
        if n_rows >= 2 * sub:
            half = (((n_rows + 1) // 2 + sub - 1) // sub) * sub
            r = min(half, n_rows)
        elif n_time >= 256 and (n_time // 2) % 128 == 0:
            tt = n_time // 2
    return int(r), int(tt)


def source_amplitudes_pallas(source_trace, wy, wx, *, force_pallas=False):
    """source_trace: (S, 1, T); wy: (ny,); wx: (nx,) -> (S, ny*nx, T).

    Matches torch: (source_trace[:, None] * wy[1,ny,1,1] * wx[1,1,nx,1])
                   .reshape(S, -1, T)
    """
    S, p, T = source_trace.shape
    assert p == 1, "PyTorch broadcast requires a size-1 middle dim"
    ny, nx = wy.shape[0], wx.shape[0]
    n_rows = ny * nx
    dtype = source_trace.dtype
    itemsize = jnp.dtype(dtype).itemsize

    # O(ny*nx) glue: fold wy into wx via the outer product, flattened in the
    # exact row order of the PyTorch reshape (row index = iy*nx + ix).
    w_col = (wy[:, None] * wx[None, :]).reshape(n_rows, 1).astype(dtype)

    out_bytes = S * n_rows * T * itemsize
    if not force_pallas and out_bytes < (4 << 20):
        # Small-problem fallback: pallas_call launch + per-step overhead would
        # dominate; a fused XLA broadcast is as fast or faster.
        return (source_trace[:, None, :, :]
                * w_col.reshape(1, n_rows, 1, 1)).reshape(S, n_rows, T)

    vmem_limit, target_bytes = _vmem_budget()
    R, Tt = _pick_tiles(n_rows, T, itemsize, target_bytes, S)

    # Row-tile axis innermost so the per-shot trace block index is constant
    # across the inner loop (trace stays resident in VMEM across row tiles).
    grid = (S, pl.cdiv(T, Tt), pl.cdiv(n_rows, R))

    in_bytes = S * T * itemsize + n_rows * itemsize
    cost = pl.CostEstimate(flops=S * n_rows * T,
                           transcendentals=0,
                           bytes_accessed=out_bytes + in_bytes)

    return pl.pallas_call(
        _source_amp_kernel,
        out_shape=jax.ShapeDtypeStruct((S, n_rows, T), dtype),
        grid=grid,
        in_specs=[
            # Weight column: depends only on the row-tile index.
            pl.BlockSpec((R, 1), lambda s, ti, ri: (ri, 0)),
            # Per-shot trace: independent of the innermost (row-tile) axis.
            pl.BlockSpec((1, 1, Tt), lambda s, ti, ri: (s, 0, ti)),
        ],
        out_specs=pl.BlockSpec((1, R, Tt), lambda s, ti, ri: (s, ri, ti)),
        compiler_params=pltpu.CompilerParams(
            dimension_semantics=("parallel", "parallel", "parallel"),
            vmem_limit_bytes=int(vmem_limit)),
        cost_estimate=cost,
    )(w_col, source_trace)


def _get_weight(loc, n, halfwidth, beta, dtype):
    # O(n) glue matching SourceAmplitudes._get_weight verbatim (no sqrt in the
    # Kaiser argument and sinc(x) applied twice, plus nan_to_num), since the
    # PyTorch module is the spec.
    # TODO(synk): torch.i0 has no Mosaic-lowerable equivalent inside the kernel,
    # so these tiny weight vectors are computed in plain JAX.
    x = jnp.arange(n, dtype=dtype) - loc
    bessel_arg = beta * (1 - (x / halfwidth) ** 2)
    bessel_arg = jnp.nan_to_num(bessel_arg, nan=0.0)
    bessel_term = jnp.i0(bessel_arg) / jnp.i0(jnp.asarray(beta, dtype)) * jnp.sinc(x)
    return (bessel_term * jnp.sinc(x)).astype(dtype)


if __name__ == "__main__":
    key = jax.random.PRNGKey(0)
    dtype = jnp.float32

    # Small shapes consistent with the module; T chosen lane-dense (128).
    S, P, T = 2, 1, 128          # shots, sources-per-shot, time samples
    ny, nx = 16, 16              # spatial grid -> 256 flattened grid points
    halfwidth = 4
    beta = 4.0
    init_loc0, init_loc1 = 7.5, 8.3

    source_trace = jax.random.normal(key, (S, P, T), dtype=dtype)

    # ParamConstrained stores logit((init-minv)/(maxv-minv)); its forward at init
    # returns exactly [init_loc0, init_loc1], which is what forward() consumes.
    loc0 = jnp.asarray(init_loc0, dtype)
    loc1 = jnp.asarray(init_loc1, dtype)

    wy = _get_weight(loc0, ny, halfwidth, beta, dtype)   # (ny,)
    wx = _get_weight(loc1, nx, halfwidth, beta, dtype)   # (nx,)

    # Force the Pallas path so the kernel genuinely runs at demo size.
    out = source_amplitudes_pallas(source_trace, wy, wx, force_pallas=True)
    out = jax.block_until_ready(out)

    # Pure-JAX reference replicating the PyTorch broadcast/reshape exactly.
    ref = (source_trace[:, None]
           * wy.reshape(1, -1, 1, 1)
           * wx.reshape(1, 1, -1, 1)).reshape(S, -1, T)

    assert out.shape == (S, ny * nx, T)
    assert out.dtype == source_trace.dtype
    assert jnp.allclose(out, ref, atol=1e-5, rtol=1e-5)
    print("KERNEL_OK")
</pallas_src>

<mosaic_0001>
module attributes {stable_mosaic.version = 11 : i64} {
  func.func @_source_amp_kernel(%arg0: i32, %arg1: i32, %arg2: i32, %arg3: memref<256x1xf32, #tpu.memory_space<vmem>>, %arg4: memref<1x1x128xf32, #tpu.memory_space<vmem>>, %arg5: memref<1x256x128xf32, #tpu.memory_space<vmem>>) attributes {dimension_semantics = [#tpu.dimension_semantics<parallel>, #tpu.dimension_semantics<parallel>, #tpu.dimension_semantics<parallel>], iteration_bounds = array<i64: 2, 1, 1>, scalar_prefetch = 0 : i64, scratch_operands = 0 : i64, tpu.core_type = #tpu.core_type<tc>, window_params = [{transform_indices = @transform_0, window_bounds = array<i64: 256, 1>}, {transform_indices = @transform_1, window_bounds = array<i64: 1, 1, 128>}, {transform_indices = @transform_2, window_bounds = array<i64: 1, 256, 128>}]} {
    %c0 = arith.constant 0 : index
    %c0_0 = arith.constant 0 : index
    %0 = vector.load %arg3[%c0, %c0_0] : memref<256x1xf32, #tpu.memory_space<vmem>>, vector<256x1xf32>
    %c0_1 = arith.constant 0 : index
    %c0_2 = arith.constant 0 : index
    %c0_3 = arith.constant 0 : index
    %1 = vector.load %arg4[%c0_1, %c0_2, %c0_3] : memref<1x1x128xf32, #tpu.memory_space<vmem>>, vector<1x1x128xf32>
    %2 = vector.shape_cast %1 : vector<1x1x128xf32> to vector<1x128xf32>
    %3 = vector.broadcast %0 : vector<256x1xf32> to vector<256x128xf32>
    %4 = vector.broadcast %2 : vector<1x128xf32> to vector<256x128xf32>
    %5 = arith.mulf %3, %4 : vector<256x128xf32>
    %c0_4 = arith.constant 0 : index
    %c0_5 = arith.constant 0 : index
    %c0_6 = arith.constant 0 : index
    %6 = vector.load %arg5[%c0_4, %c0_5, %c0_6] : memref<1x256x128xf32, #tpu.memory_space<vmem>>, vector<1x256x128xf32>
    %7 = vector.shape_cast %6 : vector<1x256x128xf32> to vector<256x128xf32>
    %8 = vector.shape_cast %5 : vector<256x128xf32> to vector<1x256x128xf32>
    tpu.vector_store %arg5[%c0_4, %c0_5, %c0_6], %8 {strides = array<i32>} : memref<1x256x128xf32, #tpu.memory_space<vmem>>, vector<1x256x128xf32>,
    return
  }
  func.func @transform_0(%arg0: i32, %arg1: i32, %arg2: i32) -> (i32, i32) {
    %c0_i32 = arith.constant 0 : i32
    %c0_i32_0 = arith.constant 0 : i32
    return %arg2, %c0_i32 : i32, i32
  }
  func.func @transform_1(%arg0: i32, %arg1: i32, %arg2: i32) -> (i32, i32, i32) {
    %c0_i32 = arith.constant 0 : i32
    %c0_i32_0 = arith.constant 0 : i32
    return %arg0, %c0_i32, %arg1 : i32, i32, i32
  }
  func.func @transform_2(%arg0: i32, %arg1: i32, %arg2: i32) -> (i32, i32, i32) {
    %c0_i32 = arith.constant 0 : i32
    return %arg0, %arg2, %arg1 : i32, i32, i32
  }
}

</mosaic_0001>

<llo_original>
// kernel: tpu_custom_call.1
$region0: #{tpu_custom_call.1}
  #allocation0 [shape = 'u32[]', space=smem, size = 0x4, offset = 0x4, fixed_abs, tag = 'smem constant byte address 0x4 - core index']
  #allocation1 [shape = 'u32[144,128]{1,0:T(1,128)}', space=vmem, size = 0x12000, scoped, tag = 'internal scratch']
  %s0 = inlined_call_operand.vmem [shape: f32[256,1], index: 0, kind: input, shape index: {}]
  %s1 = inlined_call_operand.vmem [shape: f32[2,1,128], index: 1, kind: input, shape index: {}]
  %s2 = inlined_call_operand.hbm [shape: f32[2,256,128], index: 2, kind: output, shape index: {}]
  %s3 = sld [smem:[#allocation0]]
  $region41: #{tpu_custom_call.1} parent=0
    _
  %s5 = ssub.s32 1, %s3
  %s6 = scalar_select 0, %s5, %s3
  $region1: #{tpu_custom_call.1} parent=0
    #allocation2 [shape = 'u8[262144]{0}', space=vmem, size = 0x40000, scoped, tag = 'output window, operand 0']
    #allocation3 [shape = 's32[2]{0}', space=sflag, size = 0x8, scoped, tag = 'scoped memory for tpu_custom_call.1']
    %7 = vsyncpa [#allocation3], 0
    %s8 = scalar_lea.sflag [#allocation3], 1
    %9 = vsyncpa %s8, 0
    loop: start=0, step=1, limit=4
    $region2: #{tpu_custom_call.1} parent=1 // loop_pre_header
      _
    $region3: #{tpu_custom_call.1} parent=1 // loop_header
      %s11 = sphi 0, %s15
      %p12 = scmp.ge.s32.totalorder %s11, 4
      %s18 = sphi 0, %s37
      %s19 = sphi 0, %s33
      %s20 = sphi 0, %s29
      %s21 = sphi 0, %s18
      %s22 = sphi 0, %s19
      %s23 = sphi 0, %s20
      %s24 = sphi 0, %s21
      %s25 = sphi 0, %s22
      %s26 = sphi 0, %s23
      %s40 = sphi 0, %s42
      %s43 = sphi 0, %s40
      %s44 = sphi 0, %s43
      %s60 = sphi 0, %s44
      %s68 = sphi 0, %s70
      %s71 = sphi 0, %s68
      %s72 = sphi 0, %s71
      %s88 = sphi 0, %s72
      %s98 = sphi 0, %s100
      %s101 = sphi 0, %s98
      %s102 = sphi 0, %s101
      %s118 = sphi 0, %s102
    $region4: #{tpu_custom_call.1} parent=1 // loop_header_branch
      %14 = sbr.rel (%p12) target = $region8
    $region5: #{tpu_custom_call.1} parent=1 // loop_body
      %s16 = ssub.s32 %s11, 1
      %s17 = ssub.s32 %s11, 2
      %s27 = sadd.s32 1, %s20
      %p28 = scmp.ge.s32.totalorder %s27, 1
      %s29 = scalar_select %p28, 0, %s27
      %s30 = sadd.s32 1, %s19
      %s31 = scalar_select %p28, %s30, %s19
      %p32 = scmp.ge.s32.totalorder %s31, 1
      %s33 = scalar_select %p32, 0, %s31
      %s34 = sadd.s32 1, %s18
      %s35 = scalar_select %p32, %s34, %s18
      %p36 = scmp.ge.s32.totalorder %s35, 2
      %s37 = scalar_select %p36, 0, %s35
      %s38 = ssub.s32 %s20, %s29
      %p39 = scmp.eq.s32.totalorder %s38, 0
      %s41 = sadd.s32 %s40, 1
      %s42 = scalar_select %p39, %s40, %s41
      %p45 = pneg %p39
      %p46 = scmp.eq.s32.totalorder %s11, 1
      %p47 = por %p45, %p46
      %p48 = scmp.ne.s32.totalorder %s40, %s43
      %p49 = scmp.eq.s32.totalorder %s11, 0
      %p50 = por %p48, %p49
      %p51 = scmp.ne.s32.totalorder %s40, %s43
      %p52 = scmp.eq.s32.totalorder %s16, 1
      %p53 = por %p51, %p52
      %p54 = scmp.ne.s32.totalorder %s43, %s44
      %p55 = scmp.eq.s32.totalorder %s16, 0
      %p56 = por %p54, %p55
      %p57 = scmp.ne.s32.totalorder %s43, %s44
      %p58 = scmp.eq.s32.totalorder %s17, 1
      %p59 = por %p57, %p58
      %p61 = scmp.ne.s32.totalorder %s44, %s60
      %p62 = scmp.eq.s32.totalorder %s17, 0
      %p63 = por %p61, %p62
      %s64 = ssub.s32 %s18, %s37
      %s65 = ssub.s32 %s19, %s33
      %s66 = sor.u32 %s64, %s65
      %p67 = scmp.eq.s32.totalorder %s66, 0
      %s69 = sadd.s32 %s68, 1
      %s70 = scalar_select %p67, %s68, %s69
      %p73 = pneg %p67
      %p74 = scmp.eq.s32.totalorder %s11, 1
      %p75 = por %p73, %p74
      %p76 = scmp.ne.s32.totalorder %s68, %s71
      %p77 = scmp.eq.s32.totalorder %s11, 0
      %p78 = por %p76, %p77
      %p79 = scmp.ne.s32.totalorder %s68, %s71
      %p80 = scmp.eq.s32.totalorder %s16, 1
      %p81 = por %p79, %p80
      %p82 = scmp.ne.s32.totalorder %s71, %s72
      %p83 = scmp.eq.s32.totalorder %s16, 0
      %p84 = por %p82, %p83
      %p85 = scmp.ne.s32.totalorder %s71, %s72
      %p86 = scmp.eq.s32.totalorder %s17, 1
      %p87 = por %p85, %p86
      %p89 = scmp.ne.s32.totalorder %s72, %s88
      %p90 = scmp.eq.s32.totalorder %s17, 0
      %p91 = por %p89, %p90
      %s92 = ssub.s32 %s18, %s37
      %s93 = ssub.s32 %s20, %s29
      %s94 = sor.u32 %s92, %s93
      %s95 = ssub.s32 %s19, %s33
      %s96 = sor.u32 %s94, %s95
      %p97 = scmp.eq.s32.totalorder %s96, 0
      %s99 = sadd.s32 %s98, 1
      %s100 = scalar_select %p97, %s98, %s99
      %p103 = pneg %p97
      %p104 = scmp.eq.s32.totalorder %s11, 1
      %p105 = por %p103, %p104
      %p106 = scmp.ne.s32.totalorder %s98, %s101
      %p107 = scmp.eq.s32.totalorder %s11, 0
      %p108 = por %p106, %p107
      %p109 = scmp.ne.s32.totalorder %s98, %s101
      %p110 = scmp.eq.s32.totalorder %s16, 1
      %p111 = por %p109, %p110
      %p112 = scmp.ne.s32.totalorder %s101, %s102
      %p113 = scmp.eq.s32.totalorder %s16, 0
      %p114 = por %p112, %p113
      %p115 = scmp.ne.s32.totalorder %s101, %s102
      %p116 = scmp.eq.s32.totalorder %s17, 1
      %p117 = por %p115, %p116
      %p119 = scmp.ne.s32.totalorder %s102, %s118
      %p120 = scmp.eq.s32.totalorder %s17, 0
      %p121 = por %p119, %p120
      %p122 = scmp.le.s32.totalorder 1, %s11
      %p123 = scmp.lt.s32.totalorder %s11, 3
      %p124 = pnand %p122, %p123
      %p125 = pneg %p124
      // Predicated region
      $region9: #{tpu_custom_call.1} parent=5 // pred_check
        _
      $region10: #{tpu_custom_call.1} parent=5 // pred_check_branch
        %127 = sbr.rel (%p124) target = $region12
      $region11: #{tpu_custom_call.1} parent=5 // pred_region
        %s128 = ssub.s32 %s11, 1
        // Predicated region
        $region13: #{tpu_custom_call.1} parent=11 // pred_check
          %p129 = pneg %p56
        $region14: #{tpu_custom_call.1} parent=11 // pred_check_branch
          %131 = sbr.rel (%p129) target = $region16
        $region15: #{tpu_custom_call.1} parent=11 // pred_region
          %s132 = smul.u32 32, %s23
          %p133 = scmp.lt.s32.totalorder %s132, 31
          %s134 = scalar_select %p133, %s132, 31
          %s135 = smul.addr %s134, 8
          %s136 = scalar_lea.vmem %s0, %s135
          %s137 = smul.u32 32, %s23
        $region16: #{tpu_custom_call.1} parent=11 // pred_fallthru
          _
      $region12: #{tpu_custom_call.1} parent=5 // pred_fallthru
        _
      %p138 = scmp.lt.s32.totalorder %s11, 2
      // Predicated region
      $region17: #{tpu_custom_call.1} parent=5 // pred_check
        %p139 = pneg %p138
      $region18: #{tpu_custom_call.1} parent=5 // pred_check_branch
        %141 = sbr.rel (%p139) target = $region20
      $region19: #{tpu_custom_call.1} parent=5 // pred_region
        // Predicated region
        $region21: #{tpu_custom_call.1} parent=19 // pred_check
          %p142 = pneg %p78
        $region22: #{tpu_custom_call.1} parent=19 // pred_check_branch
          %144 = sbr.rel (%p142) target = $region24
        $region23: #{tpu_custom_call.1} parent=19 // pred_region
          %p145 = scmp.lt.s32.totalorder %s18, 1
          %s146 = scalar_select %p145, %s18, 1
          %p147 = scmp.lt.s32.totalorder %s19, 0
          %s148 = scalar_select %p147, %s19, 0
          %s149 = sadd.s32 %s148, %s146
          %s150 = scalar_lea.vmem %s1, %s149
        $region24: #{tpu_custom_call.1} parent=19 // pred_fallthru
          _
      $region20: #{tpu_custom_call.1} parent=5 // pred_fallthru
        _
      %p151 = scmp.le.s32.totalorder 1, %s11
      %p152 = scmp.lt.s32.totalorder %s11, 3
      %p153 = pnand %p151, %p152
      %p154 = pneg %p153
      // Predicated region
      $region25: #{tpu_custom_call.1} parent=5 // pred_check
        _
      $region26: #{tpu_custom_call.1} parent=5 // pred_check_branch
        %156 = sbr.rel (%p153) target = $region28
      $region27: #{tpu_custom_call.1} parent=5 // pred_region
        %s157 = ssub.s32 %s11, 1
        %s158 = smul.u32 32, %s23
        %p159 = scmp.lt.s32.totalorder %s158, 31
        %s160 = scalar_select %p159, %s158, 31
        %s161 = smul.addr %s160, 8
        %s162 = scalar_lea.vmem %s0, %s161
        %p163 = pneg %p56
        %p164 = pneg %p53
        %p165 = scmp.lt.s32.totalorder %s21, 1
        %s166 = scalar_select %p165, %s21, 1
        %p167 = scmp.lt.s32.totalorder %s22, 0
        %s168 = scalar_select %p167, %s22, 0
        %s169 = sadd.s32 %s168, %s166
        %s170 = scalar_lea.vmem %s1, %s169
        %p171 = pneg %p84
        %p172 = pneg %p81
        %p173 = pneg %p114
        %p174 = pneg %p111
        %s175 = sand.u32 %s101, 1
        %s176 = scalar_lea.sflag [#allocation3], %s175
        %s177 = sand.u32 %s101, 1
        %s178 = smul.addr %s177, 256
        %s179 = scalar_lea.vmem [#allocation2], %s178
        %s180 = smul.u32 32, %s23
        %p181 = scmp.lt.s32.totalorder %s180, 31
        %s182 = scalar_select %p181, %s180, 31
        %s183 = smul.addr %s182, 8
        %s184 = scalar_lea.vmem %s0, %s183
        %s185 = smul.u32 32, %s23
        %p186 = scmp.lt.s32.totalorder %s21, 1
        %s187 = scalar_select %p186, %s21, 1
        %p188 = scmp.lt.s32.totalorder %s22, 0
        %s189 = scalar_select %p188, %s22, 0
        %s190 = sadd.s32 %s189, %s187
        %s191 = scalar_lea.vmem %s1, %s190
        %s192 = smul.u32 32, %s23
        %v193 = vld [vmem:[%s184] sm:$0xff]
        %v194 = vld [vmem:[%s184 + $0x8] sm:$0xff]
        %v195 = vld [vmem:[%s184 + $0x10] sm:$0xff]
        %v196 = vld [vmem:[%s184 + $0x18] sm:$0xff]
        %v197 = vld [vmem:[%s184 + $0x20] sm:$0xff]
        %v198 = vld [vmem:[%s184 + $0x28] sm:$0xff]
        %v199 = vld [vmem:[%s184 + $0x30] sm:$0xff]
        %v200 = vld [vmem:[%s184 + $0x38] sm:$0xff]
        %v201 = vld [vmem:[%s184 + $0x40] sm:$0xff]
        %v202 = vld [vmem:[%s184 + $0x48] sm:$0xff]
        %v203 = vld [vmem:[%s184 + $0x50] sm:$0xff]
        %v204 = vld [vmem:[%s184 + $0x58] sm:$0xff]
        %v205 = vld [vmem:[%s184 + $0x60] sm:$0xff]
        %v206 = vld [vmem:[%s184 + $0x68] sm:$0xff]
        %v207 = vld [vmem:[%s184 + $0x70] sm:$0xff]
        %v208 = vld [vmem:[%s184 + $0x78] sm:$0xff]
        %v209 = vld [vmem:[%s184 + $0x80] sm:$0xff]
        %v210 = vld [vmem:[%s184 + $0x88] sm:$0xff]
        %v211 = vld [vmem:[%s184 + $0x90] sm:$0xff]
        %v212 = vld [vmem:[%s184 + $0x98] sm:$0xff]
        %v213 = vld [vmem:[%s184 + $0xa0] sm:$0xff]
        %v214 = vld [vmem:[%s184 + $0xa8] sm:$0xff]
        %v215 = vld [vmem:[%s184 + $0xb0] sm:$0xff]
        %v216 = vld [vmem:[%s184 + $0xb8] sm:$0xff]
        %v217 = vld [vmem:[%s184 + $0xc0] sm:$0xff]
        %v218 = vld [vmem:[%s184 + $0xc8] sm:$0xff]
        %v219 = vld [vmem:[%s184 + $0xd0] sm:$0xff]
        %v220 = vld [vmem:[%s184 + $0xd8] sm:$0xff]
        %v221 = vld [vmem:[%s184 + $0xe0] sm:$0xff]
        %v222 = vld [vmem:[%s184 + $0xe8] sm:$0xff]
        %v223 = vld [vmem:[%s184 + $0xf0] sm:$0xff]
        %v224 = vld [vmem:[%s184 + $0xf8] sm:$0xff]
        %v225 = vld [vmem:[%s191] sm:$0x1]
        %227 = vset.pattern.permute.xlu0 0
        %228 = vperm.xlu0 %227, %v193
        %v229 = vpop.permute.xlu0 %228
        %232 = vset.pattern.permute.xlu0 0
        %233 = vperm.xlu0 %232, %v194
        %v234 = vpop.permute.xlu0 %233
        %237 = vset.pattern.permute.xlu0 0
        %238 = vperm.xlu0 %237, %v195
        %v239 = vpop.permute.xlu0 %238
        %242 = vset.pattern.permute.xlu0 0
        %243 = vperm.xlu0 %242, %v196
        %v244 = vpop.permute.xlu0 %243
        %247 = vset.pattern.permute.xlu0 0
        %248 = vperm.xlu0 %247, %v197
        %v249 = vpop.permute.xlu0 %248
        %252 = vset.pattern.permute.xlu0 0
        %253 = vperm.xlu0 %252, %v198
        %v254 = vpop.permute.xlu0 %253
        %257 = vset.pattern.permute.xlu0 0
        %258 = vperm.xlu0 %257, %v199
        %v259 = vpop.permute.xlu0 %258
        %262 = vset.pattern.permute.xlu0 0
        %263 = vperm.xlu0 %262, %v200
        %v264 = vpop.permute.xlu0 %263
        %267 = vset.pattern.permute.xlu0 0
        %268 = vperm.xlu0 %267, %v201
        %v269 = vpop.permute.xlu0 %268
        %272 = vset.pattern.permute.xlu0 0
        %273 = vperm.xlu0 %272, %v202
        %v274 = vpop.permute.xlu0 %273
        %277 = vset.pattern.permute.xlu0 0
        %278 = vperm.xlu0 %277, %v203
        %v279 = vpop.permute.xlu0 %278
        %282 = vset.pattern.permute.xlu0 0
        %283 = vperm.xlu0 %282, %v204
        %v284 = vpop.permute.xlu0 %283
        %287 = vset.pattern.permute.xlu0 0
        %288 = vperm.xlu0 %287, %v205
        %v289 = vpop.permute.xlu0 %288
        %292 = vset.pattern.permute.xlu0 0
        %293 = vperm.xlu0 %292, %v206
        %v294 = vpop.permute.xlu0 %293
        %297 = vset.pattern.permute.xlu0 0
        %298 = vperm.xlu0 %297, %v207
        %v299 = vpop.permute.xlu0 %298
        %302 = vset.pattern.permute.xlu0 0
        %303 = vperm.xlu0 %302, %v208
        %v304 = vpop.permute.xlu0 %303
        %307 = vset.pattern.permute.xlu0 0
        %308 = vperm.xlu0 %307, %v209
        %v309 = vpop.permute.xlu0 %308
        %312 = vset.pattern.permute.xlu0 0
        %313 = vperm.xlu0 %312, %v210
        %v314 = vpop.permute.xlu0 %313
        %317 = vset.pattern.permute.xlu0 0
        %318 = vperm.xlu0 %317, %v211
        %v319 = vpop.permute.xlu0 %318
        %322 = vset.pattern.permute.xlu0 0
        %323 = vperm.xlu0 %322, %v212
        %v324 = vpop.permute.xlu0 %323
        %327 = vset.pattern.permute.xlu0 0
        %328 = vperm.xlu0 %327, %v213
        %v329 = vpop.permute.xlu0 %328
        %332 = vset.pattern.permute.xlu0 0
        %333 = vperm.xlu0 %332, %v214
        %v334 = vpop.permute.xlu0 %333
        %337 = vset.pattern.permute.xlu0 0
        %338 = vperm.xlu0 %337, %v215
        %v339 = vpop.permute.xlu0 %338
        %342 = vset.pattern.permute.xlu0 0
        %343 = vperm.xlu0 %342, %v216
        %v344 = vpop.permute.xlu0 %343
        %347 = vset.pattern.permute.xlu0 0
        %348 = vperm.xlu0 %347, %v217
        %v349 = vpop.permute.xlu0 %348
        %352 = vset.pattern.permute.xlu0 0
        %353 = vperm.xlu0 %352, %v218
        %v354 = vpop.permute.xlu0 %353
        %357 = vset.pattern.permute.xlu0 0
        %358 = vperm.xlu0 %357, %v219
        %v359 = vpop.permute.xlu0 %358
        %362 = vset.pattern.permute.xlu0 0
        %363 = vperm.xlu0 %362, %v220
        %v364 = vpop.permute.xlu0 %363
        %367 = vset.pattern.permute.xlu0 0
        %368 = vperm.xlu0 %367, %v221
        %v369 = vpop.permute.xlu0 %368
        %372 = vset.pattern.permute.xlu0 0
        %373 = vperm.xlu0 %372, %v222
        %v374 = vpop.permute.xlu0 %373
        %377 = vset.pattern.permute.xlu0 0
        %378 = vperm.xlu0 %377, %v223
        %v379 = vpop.permute.xlu0 %378
        %382 = vset.pattern.permute.xlu0 0
        %383 = vperm.xlu0 %382, %v224
        %v384 = vpop.permute.xlu0 %383
        %v387 = vlaneseq
        %v388 = vshrl.u32 %v387, 7
        %v389 = vsub.s32 0, %v388
        %v390 = vrot.slane %v225, %v389
        %v392 = vmul.f32 %v229, %v390
        %v393 = vmul.f32 %v234, %v390
        %v394 = vmul.f32 %v239, %v390
        %v395 = vmul.f32 %v244, %v390
        %v396 = vmul.f32 %v249, %v390
        %v397 = vmul.f32 %v254, %v390
        %v398 = vmul.f32 %v259, %v390
        %v399 = vmul.f32 %v264, %v390
        %v400 = vmul.f32 %v269, %v390
        %v401 = vmul.f32 %v274, %v390
        %v402 = vmul.f32 %v279, %v390
        %v403 = vmul.f32 %v284, %v390
        %v404 = vmul.f32 %v289, %v390
        %v405 = vmul.f32 %v294, %v390
        %v406 = vmul.f32 %v299, %v390
        %v407 = vmul.f32 %v304, %v390
        %v408 = vmul.f32 %v309, %v390
        %v409 = vmul.f32 %v314, %v390
        %v410 = vmul.f32 %v319, %v390
        %v411 = vmul.f32 %v324, %v390
        %v412 = vmul.f32 %v329, %v390
        %v413 = vmul.f32 %v334, %v390
        %v414 = vmul.f32 %v339, %v390
        %v415 = vmul.f32 %v344, %v390
        %v416 = vmul.f32 %v349, %v390
        %v417 = vmul.f32 %v354, %v390
        %v418 = vmul.f32 %v359, %v390
        %v419 = vmul.f32 %v364, %v390
        %v420 = vmul.f32 %v369, %v390
        %v421 = vmul.f32 %v374, %v390
        %v422 = vmul.f32 %v379, %v390
        %v423 = vmul.f32 %v384, %v390
        %424 = vst [vmem:[%s179] sm:$0xff] %v392
        %425 = vst [vmem:[%s179 + $0x8] sm:$0xff] %v393
        %426 = vst [vmem:[%s179 + $0x10] sm:$0xff] %v394
        %427 = vst [vmem:[%s179 + $0x18] sm:$0xff] %v395
        %428 = vst [vmem:[%s179 + $0x20] sm:$0xff] %v396
        %429 = vst [vmem:[%s179 + $0x28] sm:$0xff] %v397
        %430 = vst [vmem:[%s179 + $0x30] sm:$0xff] %v398
        %431 = vst [vmem:[%s179 + $0x38] sm:$0xff] %v399
        %432 = vst [vmem:[%s179 + $0x40] sm:$0xff] %v400
        %433 = vst [vmem:[%s179 + $0x48] sm:$0xff] %v401
        %434 = vst [vmem:[%s179 + $0x50] sm:$0xff] %v402
        %435 = vst [vmem:[%s179 + $0x58] sm:$0xff] %v403
        %436 = vst [vmem:[%s179 + $0x60] sm:$0xff] %v404
        %437 = vst [vmem:[%s179 + $0x68] sm:$0xff] %v405
        %438 = vst [vmem:[%s179 + $0x70] sm:$0xff] %v406
        %439 = vst [vmem:[%s179 + $0x78] sm:$0xff] %v407
        %440 = vst [vmem:[%s179 + $0x80] sm:$0xff] %v408
        %441 = vst [vmem:[%s179 + $0x88] sm:$0xff] %v409
        %442 = vst [vmem:[%s179 + $0x90] sm:$0xff] %v410
        %443 = vst [vmem:[%s179 + $0x98] sm:$0xff] %v411
        %444 = vst [vmem:[%s179 + $0xa0] sm:$0xff] %v412
        %445 = vst [vmem:[%s179 + $0xa8] sm:$0xff] %v413
        %446 = vst [vmem:[%s179 + $0xb0] sm:$0xff] %v414
        %447 = vst [vmem:[%s179 + $0xb8] sm:$0xff] %v415
        %448 = vst [vmem:[%s179 + $0xc0] sm:$0xff] %v416
        %449 = vst [vmem:[%s179 + $0xc8] sm:$0xff] %v417
        %450 = vst [vmem:[%s179 + $0xd0] sm:$0xff] %v418
        %451 = vst [vmem:[%s179 + $0xd8] sm:$0xff] %v419
        %452 = vst [vmem:[%s179 + $0xe0] sm:$0xff] %v420
        %453 = vst [vmem:[%s179 + $0xe8] sm:$0xff] %v421
        %454 = vst [vmem:[%s179 + $0xf0] sm:$0xff] %v422
        %455 = vst [vmem:[%s179 + $0xf8] sm:$0xff] %v423
        %s456 = sand.u32 %s101, 1
        %s457 = scalar_lea.sflag [#allocation3], %s456
        %s458 = sand.u32 %s101, 1
        %s459 = smul.addr %s458, 256
        %s460 = scalar_lea.vmem [#allocation2], %s459
        // Predicated region
        $region29: #{tpu_custom_call.1} parent=27 // pred_check
          %p461 = pneg %p111
        $region30: #{tpu_custom_call.1} parent=27 // pred_check_branch
          %463 = sbr.rel (%p461) target = $region32
        $region31: #{tpu_custom_call.1} parent=27 // pred_region
          %s464 = smul.u32 32, %s23
          %s466 = ssub.s32 4096, 4096
          %467 = vsyncadd %s457, %s466
          %s468 = sadd.s32 %s22, %s464
          %s469 = smul.addr %s21, 32
          %s470 = sadd.s32 %s468, %s469
          %s471 = smul.addr %s470, 128
          %s472 = scalar_lea.hbm %s2, %s471
          %s473 = sshll.u32 %s460, 4
          %s474 = int_to_ptr.vmem [resolvable:$true] %s473
          %479 = dma.vmem_to_hbm [thread:$0]  %s474, 4096, %s472, %s457, 128, 128, 8
        $region32: #{tpu_custom_call.1} parent=27 // pred_fallthru
          _
      $region28: #{tpu_custom_call.1} parent=5 // pred_fallthru
        _
      %p480 = scmp.le.s32.totalorder 2, %s11
      // Predicated region
      $region33: #{tpu_custom_call.1} parent=5 // pred_check
        %p481 = pneg %p480
      $region34: #{tpu_custom_call.1} parent=5 // pred_check_branch
        %483 = sbr.rel (%p481) target = $region36
      $region35: #{tpu_custom_call.1} parent=5 // pred_region
        %s484 = ssub.s32 %s11, 2
        // Predicated region
        $region37: #{tpu_custom_call.1} parent=35 // pred_check
          %p485 = pneg %p117
        $region38: #{tpu_custom_call.1} parent=35 // pred_check_branch
          %487 = sbr.rel (%p485) target = $region40
        $region39: #{tpu_custom_call.1} parent=35 // pred_region
          %s488 = sand.u32 %s102, 1
          %s489 = scalar_lea.sflag [#allocation3], %s488
          %s490 = sand.u32 %s102, 1
          %s491 = smul.addr %s490, 256
          %s492 = scalar_lea.vmem [#allocation2], %s491
          %493 = dma.done %s489, 4096
        $region40: #{tpu_custom_call.1} parent=35 // pred_fallthru
          _
      $region36: #{tpu_custom_call.1} parent=5 // pred_fallthru
        _
    $region6: #{tpu_custom_call.1} parent=1 // loop_footer
      %s15 = sadd.s32 1, %s11
    $region7: #{tpu_custom_call.1} parent=1 // loop_footer_branch
      %10 = sbr.rel target = $region3
    $region8: #{tpu_custom_call.1} parent=1 // loop_exit
      _
    %494 = vsyncpa [#allocation3], 1
    %s495 = scalar_lea.sflag [#allocation3], 1
    %496 = vsyncpa %s495, 1

</llo_original>
